<compile_context>
chip_gen: v7x
topology: tpu7x:2x2x1
jax: 0.10.0
libtpu: 0.0.40
codegen_flags: <defaults>
</compile_context>

<pallas_src>
import functools

import jax
import jax.numpy as jnp
from jax.experimental import pallas as pl
from jax.experimental.pallas import tpu as pltpu

# v7x has only 64 MiB physical VMEM per TensorCore -> cap the scoped limit at
# 48 MiB and size blocks so (2 arrays x 2 pipeline buffers x block + roll temp)
# stays under it.  v5e/v6e (128 MiB physical) are trivially fine with this cap.
_VMEM_LIMIT_CAP = 48 * 1024 * 1024
_TARGET_BLOCK_BYTES = 4 * 1024 * 1024   # 4-6 MiB amortizes ~0.35us/step on v7x
_MAX_BLOCK_BYTES = 8 * 1024 * 1024


def _cdiv(a, b):
    return -(-a // b)


def _sublane_multiple(dtype):
    """Native sublane packing: 8 for 4-byte, 16 for 2-byte, 32 for 1-byte dtypes."""
    itemsize = jnp.dtype(dtype).itemsize
    return max(8, 32 // max(itemsize, 1))


def _shift_rows_kernel(x_ref, o_ref, *, width, period):
    """x_ref, o_ref: (BC, L) lane-dense blocks; each row packs L // period images.

    Per packed image (period = H*W flat pixels):
      out[j] = x[j - width] for j >= width, else 0
    i.e. shift each image down by one row of `width` pixels and zero-fill.
    """
    x = x_ref[...]
    shifted = pltpu.roll(x, shift=width, axis=1)
    if period == x.shape[1]:
        # One image per flat row: full-block store, then clear the wrapped
        # first `width` lanes with a single narrow store (no per-vreg
        # iota/compare/select work - keeps v7x safely DMA-bound).
        o_ref[...] = shifted
        o_ref[:, :width] = jnp.zeros((x.shape[0], width), dtype=o_ref.dtype)
    else:
        # Several tiny images packed per row: periodic zero mask.
        lane = jax.lax.broadcasted_iota(jnp.int32, x.shape, dimension=1)
        o_ref[...] = jnp.where(lane % period >= width, shifted,
                               jnp.zeros_like(shifted))


def _choose_layout(nc, hw, dtype):
    """Pick (rows, row_len, bc, period) for the flat view and its blocking."""
    itemsize = jnp.dtype(dtype).itemsize
    sub = _sublane_multiple(dtype)

    # Lane density: if one image is narrower than 128 lanes, pack g images per
    # flat row (g must divide N*C; reshape stays free).
    g = 1
    if hw < 128:
        for cand in range(1, nc + 1):
            if nc % cand == 0 and cand * hw >= 128:
                g = cand
                break
        else:
            g = nc
    rows, row_len = nc // g, g * hw
    row_bytes = row_len * itemsize

    # Largest sublane-multiple row-count per block within the byte budget.
    bc = max(sub, (_TARGET_BLOCK_BYTES // max(row_bytes, 1)) // sub * sub)
    max_bc = max(sub, (_MAX_BLOCK_BYTES // max(row_bytes, 1)) // sub * sub)
    bc = min(bc, max_bc)

    if bc >= rows:
        bc = rows                       # single full-extent block (always legal)
        if rows >= 2 * sub:
            # Keep >= 2 grid steps so both v7x TensorCores get work.
            bc = _cdiv(_cdiv(rows, 2), sub) * sub
    return rows, row_len, bc, hw


def shift_forward(x):
    """Pallas forward of `shift` for an (N, C, H, W) array (shape preserved)."""
    N, C, H, W = x.shape
    nc, hw = N * C, H * W

    rows, row_len, bc, period = _choose_layout(nc, hw, x.dtype)
    # Free reshape: NCHW is contiguous, every flat row is lane-dense.
    x_flat = x.reshape(rows, row_len)

    grid = (_cdiv(rows, bc),)
    block_bytes = bc * row_len * x.dtype.itemsize
    vmem_limit = int(min(_VMEM_LIMIT_CAP,
                         max(32 * 1024 * 1024, 5 * block_bytes + (4 << 20))))
    nbytes = x.size * x.dtype.itemsize

    kernel = functools.partial(_shift_rows_kernel, width=W, period=period)

    out_flat = pl.pallas_call(
        kernel,
        out_shape=jax.ShapeDtypeStruct((rows, row_len), x.dtype),
        grid_spec=pltpu.PrefetchScalarGridSpec(
            num_scalar_prefetch=0,
            grid=grid,
            in_specs=[pl.BlockSpec((bc, row_len), lambda i: (i, 0))],
            out_specs=pl.BlockSpec((bc, row_len), lambda i: (i, 0)),
        ),
        compiler_params=pltpu.CompilerParams(
            dimension_semantics=("parallel",),
            vmem_limit_bytes=vmem_limit,
        ),
        cost_estimate=pl.CostEstimate(
            flops=0, transcendentals=0, bytes_accessed=2 * nbytes),
    )(x_flat)

    return out_flat.reshape(N, C, H, W)


if __name__ == "__main__":
    key = jax.random.PRNGKey(0)
    N, C, H, W = 2, 4, 16, 16
    x = jax.random.normal(key, (N, C, H, W), dtype=jnp.float32)

    out = jax.block_until_ready(shift_forward(x))

    # Reference: pad one zero row on top, drop the last row.
    ref = jnp.pad(x, ((0, 0), (0, 0), (1, 0), (0, 0)))[:, :, :H, :]
    assert out.shape == (N, C, H, W)
    assert jnp.allclose(out, ref), "mismatch vs reference"

    print("KERNEL_OK")
</pallas_src>

<mosaic_0001>
module attributes {stable_mosaic.version = 11 : i64} {
  func.func @_shift_rows_kernel(%arg0: i32, %arg1: memref<8x256xf32, #tpu.memory_space<vmem>>, %arg2: memref<8x256xf32, #tpu.memory_space<vmem>>) attributes {dimension_semantics = [#tpu.dimension_semantics<parallel>], iteration_bounds = array<i64: 1>, scalar_prefetch = 0 : i64, scratch_operands = 0 : i64, tpu.core_type = #tpu.core_type<tc>, window_params = [{transform_indices = @transform_0, window_bounds = array<i64: 8, 256>}, {transform_indices = @transform_1, window_bounds = array<i64: 8, 256>}]} {
    %c0 = arith.constant 0 : index
    %c0_0 = arith.constant 0 : index
    %0 = vector.load %arg1[%c0, %c0_0] : memref<8x256xf32, #tpu.memory_space<vmem>>, vector<8x256xf32>
    %c16_i32 = arith.constant 16 : i32
    %1 = tpu.dynamic_rotate %0 by %c16_i32 dim 1 : vector<8x256xf32>, i32 -> vector<8x256xf32>
    %c0_1 = arith.constant 0 : index
    %c0_2 = arith.constant 0 : index
    %2 = vector.load %arg2[%c0_1, %c0_2] : memref<8x256xf32, #tpu.memory_space<vmem>>, vector<8x256xf32>
    tpu.vector_store %arg2[%c0_1, %c0_2], %1 {strides = array<i32>} : memref<8x256xf32, #tpu.memory_space<vmem>>, vector<8x256xf32>,
    %cst = arith.constant 0.000000e+00 : f32
    %3 = vector.broadcast %cst : f32 to vector<8x16xf32>
    %c0_3 = arith.constant 0 : index
    %c0_4 = arith.constant 0 : index
    %4 = vector.load %arg2[%c0_3, %c0_4] : memref<8x256xf32, #tpu.memory_space<vmem>>, vector<8x16xf32>
    tpu.vector_store %arg2[%c0_3, %c0_4], %3 {strides = array<i32>} : memref<8x256xf32, #tpu.memory_space<vmem>>, vector<8x16xf32>,
    return
  }
  func.func @transform_0(%arg0: i32) -> (i32, i32) {
    %c0_i32 = arith.constant 0 : i32
    %c0_i32_0 = arith.constant 0 : i32
    return %arg0, %c0_i32 : i32, i32
  }
  func.func @transform_1(%arg0: i32) -> (i32, i32) {
    %c0_i32 = arith.constant 0 : i32
    %c0_i32_0 = arith.constant 0 : i32
    return %arg0, %c0_i32 : i32, i32
  }
}

</mosaic_0001>

<llo_original>
// kernel: tpu_custom_call.1
$region0: #{tpu_custom_call.1}
  #allocation0 [shape = 'u32[]', space=smem, size = 0x4, offset = 0x4, fixed_abs, tag = 'smem constant byte address 0x4 - core index']
  #allocation1 [shape = 'u32[144,128]{1,0:T(1,128)}', space=vmem, size = 0x12000, scoped, tag = 'internal scratch']
  %s0 = inlined_call_operand.hbm [shape: f32[8,256], index: 0, kind: input, shape index: {}]
  %s1 = inlined_call_operand.hbm [shape: f32[8,256], index: 1, kind: output, shape index: {}]
  %s2 = sld [smem:[#allocation0]]
  $region18: #{tpu_custom_call.1} parent=0
    _
  %s4 = ssub.s32 1, %s2
  %s5 = scalar_select 0, %s4, %s2
  $region1: #{tpu_custom_call.1} parent=0
    #allocation2 [shape = 'u8[8192]{0}', space=vmem, size = 0x2000, scoped, tag = 'input window, operand 0, single buffered']
    #allocation3 [shape = 's32[1]{0}', space=sflag, size = 0x4, scoped, tag = 'scoped memory for tpu_custom_call.1']
    #allocation4 [shape = 's32[1]{0}', space=sflag, size = 0x4, scoped, tag = 'scoped memory for tpu_custom_call.1']
    #allocation5 [shape = 'u8[8192]{0}', space=vmem, size = 0x2000, scoped, tag = 'output window, operand 0, single buffered']
    %6 = vsyncpa [#allocation3], 0
    %7 = vsyncpa [#allocation4], 0
    // Predicated region
    $region2: #{tpu_custom_call.1} parent=1 // pred_check
      _
    $region3: #{tpu_custom_call.1} parent=1 // pred_check_branch
      %9 = sbr.rel (0) target = $region5
    $region4: #{tpu_custom_call.1} parent=1 // pred_region
      %s11 = ssub.s32 256, 256
      %12 = vsyncadd [#allocation3], %s11
      %s14 = sshll.u32 [#allocation2], 4
      %s15 = int_to_ptr.vmem [resolvable:$true] %s14
      %17 = dma.hbm_to_vmem [thread:$0]  %s0, 256, %s15, [#allocation3]
    $region5: #{tpu_custom_call.1} parent=1 // pred_fallthru
      _
    // Predicated region
    $region6: #{tpu_custom_call.1} parent=1 // pred_check
      _
    $region7: #{tpu_custom_call.1} parent=1 // pred_check_branch
      %19 = sbr.rel (0) target = $region9
    $region8: #{tpu_custom_call.1} parent=1 // pred_region
      %20 = dma.done [#allocation3], 256
    $region9: #{tpu_custom_call.1} parent=1 // pred_fallthru
      _
    %v21 = vld [vmem:[#allocation2] sm:$0xff]
    %v22 = vld [vmem:[#allocation2 + $0x8] sm:$0xff]
    %23 = vrot.lane.b32.xlu0 %v21, 16
    %v24 = vpop.permute.xlu0 %23
    %25 = vrot.lane.b32.xlu0 %v22, 16
    %v26 = vpop.permute.xlu0 %25
    %v27 = vlaneseq
    %v28 = vand.u32 %v27, 127
    %vm29 = vcmp.lt.s32.totalorder %v28, 16
    %v30 = vsel %vm29, %v24, %v26
    %v31 = vsel %vm29, %v26, %v24
    %32 = vst [vmem:[#allocation5] sm:$0xff] %v31
    %33 = vst [vmem:[#allocation5 + $0x8] sm:$0xff] %v30
    %vm34 = vcmask 130048
    %35 = vst.msk [vmem:[#allocation5] sm:$0xff] %vm34, 0.0
    // Predicated region
    $region10: #{tpu_custom_call.1} parent=1 // pred_check
      _
    $region11: #{tpu_custom_call.1} parent=1 // pred_check_branch
      %37 = sbr.rel (0) target = $region13
    $region12: #{tpu_custom_call.1} parent=1 // pred_region
      %s39 = ssub.s32 256, 256
      %40 = vsyncadd [#allocation4], %s39
      %s42 = sshll.u32 [#allocation5], 4
      %s43 = int_to_ptr.vmem [resolvable:$true] %s42
      %45 = dma.vmem_to_hbm [thread:$0]  %s43, 256, %s1, [#allocation4]
    $region13: #{tpu_custom_call.1} parent=1 // pred_fallthru
      _
    // Predicated region
    $region14: #{tpu_custom_call.1} parent=1 // pred_check
      _
    $region15: #{tpu_custom_call.1} parent=1 // pred_check_branch
      %47 = sbr.rel (0) target = $region17
    $region16: #{tpu_custom_call.1} parent=1 // pred_region
      %48 = dma.done [#allocation4], 256
    $region17: #{tpu_custom_call.1} parent=1 // pred_fallthru
      _
    %49 = vsyncpa [#allocation3], 1
    %50 = vsyncpa [#allocation4], 1

</llo_original>
